<compile_context>
chip_gen: v7x
topology: tpu7x:2x2x1
jax: 0.10.0
libtpu: 0.0.40
codegen_flags: <defaults>
</compile_context>

<pallas_src>
import functools

import jax
import jax.numpy as jnp
from jax.experimental import pallas as pl
from jax.experimental.pallas import tpu as pltpu


def _round_up(x, m):
    return ((x + m - 1) // m) * m


def _embed_kernel(ids_ref, table_ref, *rest, vocab, has_dropout):
    """One grid step: gather a (T, D) tile of embeddings via a one-hot MXU
    matmul against the VMEM-resident table, optionally apply the pre-scaled
    inverted-dropout mask, and store a lane/sublane-dense (T, D) block."""
    if has_dropout:
        mask_ref, out_ref = rest
    else:
        (out_ref,) = rest

    ids = ids_ref[...]                                       # (T, 1) int32
    t = ids.shape[0]
    # (T, V) one-hot selection matrix; the gather itself runs on the MXU.
    col = jax.lax.broadcasted_iota(jnp.int32, (t, vocab), 1)
    one_hot = (col == ids).astype(table_ref.dtype)           # (T, V)
    emb = jnp.dot(one_hot, table_ref[...],
                  preferred_element_type=jnp.float32)        # (T, D) f32
    if has_dropout:
        emb = emb * mask_ref[...].astype(jnp.float32)
    out_ref[...] = emb.astype(out_ref.dtype)


def embed_layer(ids, table, *, dropout_p=0.0, rng_key=None, tokens_per_tile=256):
    """Pallas equivalent of EmbedLayer.forward.

    ids:   (batch, seq) int32
    table: (num_embeddings, embedding_dim) float32  (padding row pre-zeroed)
    returns (batch, seq, embedding_dim) float32
    """
    B, S = ids.shape
    V, D = table.shape
    N = B * S
    ids_flat = ids.reshape(N).astype(jnp.int32)

    # Token tile: multiple of 8 sublanes, capped at tokens_per_tile.
    # (Sweep tokens_per_tile upward on v7x's faster HBM; 256 is fine on v5e/v6e.)
    T = int(min(tokens_per_tile, _round_up(N, 8)))
    N_pad = _round_up(N, T)
    if N_pad != N:
        ids_flat = jnp.pad(ids_flat, (0, N_pad - N))  # pad with id 0 (valid row)
    ids_col = ids_flat.reshape(N_pad, 1)

    apply_dropout = float(dropout_p) > 0.0
    inputs = [ids_col, table]
    in_specs = [
        pl.BlockSpec((T, 1), lambda t: (t, 0)),       # ids tile
        pl.BlockSpec((V, D), lambda t: (0, 0)),       # whole table, VMEM-resident
    ]
    if apply_dropout:
        # Host-generated, pre-scaled inverted-dropout mask (keep / (1-p)).
        # Kept outside the kernel because pltpu PRNG primitives have no
        # CPU/interpret lowering; the multiply is still fused in-kernel.
        if rng_key is None:
            rng_key = jax.random.PRNGKey(0)
        p = float(dropout_p)
        if p >= 1.0:
            mask = jnp.zeros((N_pad, D), dtype=table.dtype)
        else:
            keep = jax.random.bernoulli(rng_key, 1.0 - p, (N_pad, D))
            mask = keep.astype(table.dtype) * (1.0 / (1.0 - p))
        inputs.append(mask)
        in_specs.append(pl.BlockSpec((T, D), lambda t: (t, 0)))

    kernel = functools.partial(_embed_kernel, vocab=V, has_dropout=apply_dropout)

    # TODO(synk): for vocabularies too large to keep resident in VMEM
    # (budget ~24-32 MiB on v7x, more on v5e/v6e), switch the table to
    # memory_space=pl.ANY and do batched manual pltpu.make_async_copy row
    # gathers with a >2-deep buffer ring instead of the one-hot matmul.
    out = pl.pallas_call(
        kernel,
        out_shape=jax.ShapeDtypeStruct((N_pad, D), table.dtype),
        grid=(N_pad // T,),
        in_specs=in_specs,
        out_specs=pl.BlockSpec((T, D), lambda t: (t, 0)),
        compiler_params=pltpu.CompilerParams(
            dimension_semantics=("parallel",)),     # tiles independent -> 2 TCs on v7x
    )(*inputs)

    return out[:N].reshape(B, S, D)


def make_embedding_table(key, num_embeddings, embedding_dim, ignore=None):
    """Deterministic nn.Embedding-style init: N(0, 1), padding_idx row zeroed."""
    table = jax.random.normal(key, (num_embeddings, embedding_dim),
                              dtype=jnp.float32)
    if ignore is not None:
        table = table.at[ignore].set(0.0)
    return table


if __name__ == "__main__":
    key = jax.random.PRNGKey(0)
    k_w, k_ids, k_drop = jax.random.split(key, 3)

    num_embeddings = 64
    embedding_dim = 128
    batch, seq = 2, 8
    ignore = 0  # padding_idx

    table = make_embedding_table(k_w, num_embeddings, embedding_dim, ignore)
    ids = jax.random.randint(k_ids, (batch, seq), 0, num_embeddings,
                             dtype=jnp.int32)

    # dropout == 0 path: must match a plain gather.
    out = jax.block_until_ready(embed_layer(ids, table, dropout_p=0.0))
    ref = jnp.take(table, ids.reshape(-1), axis=0).reshape(
        batch, seq, embedding_dim)
    assert out.shape == (batch, seq, embedding_dim)
    assert out.dtype == jnp.float32
    assert jnp.allclose(out, ref, atol=1e-5, rtol=1e-5), \
        "Pallas gather mismatch vs jnp.take reference"

    # dropout > 0 path (training-mode inverted dropout): every surviving
    # element must equal ref / (1 - p); dropped elements are exactly 0.
    p = 0.5
    out_drop = jax.block_until_ready(
        embed_layer(ids, table, dropout_p=p, rng_key=k_drop))
    assert out_drop.shape == (batch, seq, embedding_dim)
    assert bool(jnp.all(jnp.isfinite(out_drop)))
    scaled_ref = ref / (1.0 - p)
    ok = jnp.where(out_drop != 0.0, jnp.abs(out_drop - scaled_ref) < 1e-4, True)
    assert bool(jnp.all(ok)), "dropout output has values not in {0, ref/(1-p)}"

    # dropout == 1.0 path: all zeros (PyTorch training-mode behavior).
    out_zero = jax.block_until_ready(
        embed_layer(ids, table, dropout_p=1.0, rng_key=k_drop))
    assert bool(jnp.all(out_zero == 0.0))

    # TODO(synk): load_pretrained (dict-of-numpy checkpoint merge) is host-side
    # parameter setup, not kernel work; weights are synthesized in-script.
    print("KERNEL_OK")
</pallas_src>

<mosaic_0001>
module attributes {stable_mosaic.version = 11 : i64} {
  func.func @_embed_kernel(%arg0: i32, %arg1: memref<16x1xi32, #tpu.memory_space<vmem>>, %arg2: memref<64x128xf32, #tpu.memory_space<vmem>>, %arg3: memref<16x128xf32, #tpu.memory_space<vmem>>) attributes {dimension_semantics = [#tpu.dimension_semantics<parallel>], iteration_bounds = array<i64: 1>, scalar_prefetch = 0 : i64, scratch_operands = 0 : i64, tpu.core_type = #tpu.core_type<tc>, window_params = [{transform_indices = @transform_0, window_bounds = array<i64: 16, 1>}, {pipeline_mode = #tpu.pipeline_mode<synchronous>, transform_indices = @transform_1, window_bounds = array<i64: 64, 128>}, {transform_indices = @transform_2, window_bounds = array<i64: 16, 128>}]} {
    %c0 = arith.constant 0 : index
    %c0_0 = arith.constant 0 : index
    %0 = vector.load %arg1[%c0, %c0_0] : memref<16x1xi32, #tpu.memory_space<vmem>>, vector<16x1xi32>
    %1 = tpu.iota {dimensions = array<i32: 1>} : vector<16x64xi32>
    %2 = vector.broadcast %0 : vector<16x1xi32> to vector<16x64xi32>
    %3 = arith.cmpi eq, %1, %2 : vector<16x64xi32>
    %4 = arith.extui %3 : vector<16x64xi1> to vector<16x64xi32>
    %5 = arith.sitofp %4 : vector<16x64xi32> to vector<16x64xf32>
    %c0_1 = arith.constant 0 : index
    %c0_2 = arith.constant 0 : index
    %6 = vector.load %arg2[%c0_1, %c0_2] : memref<64x128xf32, #tpu.memory_space<vmem>>, vector<64x128xf32>
    %cst = arith.constant dense<0.000000e+00> : vector<16x128xf32>
    %7 = tpu.matmul %5, %6, %cst {dimension_numbers = #tpu.dot_dimension_numbers<[1], [0], [0], [1], [0, 0, 1, 1], [], []>} : vector<16x64xf32>, vector<64x128xf32>, vector<16x128xf32> -> vector<16x128xf32>
    %c0_3 = arith.constant 0 : index
    %c0_4 = arith.constant 0 : index
    %8 = vector.load %arg3[%c0_3, %c0_4] : memref<16x128xf32, #tpu.memory_space<vmem>>, vector<16x128xf32>
    tpu.vector_store %arg3[%c0_3, %c0_4], %7 {strides = array<i32>} : memref<16x128xf32, #tpu.memory_space<vmem>>, vector<16x128xf32>,
    return
  }
  func.func @transform_0(%arg0: i32) -> (i32, i32) {
    %c0_i32 = arith.constant 0 : i32
    %c0_i32_0 = arith.constant 0 : i32
    return %arg0, %c0_i32 : i32, i32
  }
  func.func @transform_1(%arg0: i32) -> (i32, i32) {
    %c0_i32 = arith.constant 0 : i32
    %c0_i32_0 = arith.constant 0 : i32
    %c0_i32_1 = arith.constant 0 : i32
    return %c0_i32, %c0_i32_0 : i32, i32
  }
  func.func @transform_2(%arg0: i32) -> (i32, i32) {
    %c0_i32 = arith.constant 0 : i32
    %c0_i32_0 = arith.constant 0 : i32
    return %arg0, %c0_i32 : i32, i32
  }
}

</mosaic_0001>

<llo_original>
// kernel: tpu_custom_call.1
$region0: #{tpu_custom_call.1}
  #allocation0 [shape = 'u32[]', space=smem, size = 0x4, offset = 0x4, fixed_abs, tag = 'smem constant byte address 0x4 - core index']
  #allocation1 [shape = 'u32[144,128]{1,0:T(1,128)}', space=vmem, size = 0x12000, scoped, tag = 'internal scratch']
  %s0 = inlined_call_operand.vmem [shape: s32[16,1], index: 0, kind: input, shape index: {}]
  %s1 = inlined_call_operand.hbm [shape: f32[64,128], index: 1, kind: input, shape index: {}]
  %s2 = inlined_call_operand.hbm [shape: f32[16,128], index: 2, kind: output, shape index: {}]
  %s3 = sld [smem:[#allocation0]]
  $region22: #{tpu_custom_call.1} parent=0
    _
  %s5 = ssub.s32 1, %s3
  %s6 = scalar_select 0, %s5, %s3
  $region1: #{tpu_custom_call.1} parent=0
    #allocation2 [shape = 'u8[32768]{0}', space=vmem, size = 0x8000, scoped, tag = 'input window, operand 1, single buffered']
    #allocation3 [shape = 's32[1]{0}', space=sflag, size = 0x4, scoped, tag = 'scoped memory for tpu_custom_call.1']
    #allocation4 [shape = 's32[1]{0}', space=sflag, size = 0x4, scoped, tag = 'scoped memory for tpu_custom_call.1']
    #allocation5 [shape = 'u8[8192]{0}', space=vmem, size = 0x2000, scoped, tag = 'output window, operand 0, single buffered']
    %7 = vsyncpa [#allocation3], 0
    %8 = vsyncpa [#allocation4], 0
    // Predicated region
    $region2: #{tpu_custom_call.1} parent=1 // pred_check
      _
    $region3: #{tpu_custom_call.1} parent=1 // pred_check_branch
      %10 = sbr.rel (0) target = $region5
    $region4: #{tpu_custom_call.1} parent=1 // pred_region
      _
    $region5: #{tpu_custom_call.1} parent=1 // pred_fallthru
      _
    // Predicated region
    $region6: #{tpu_custom_call.1} parent=1 // pred_check
      _
    $region7: #{tpu_custom_call.1} parent=1 // pred_check_branch
      %12 = sbr.rel (0) target = $region9
    $region8: #{tpu_custom_call.1} parent=1 // pred_region
      %s14 = ssub.s32 1024, 1024
      %15 = vsyncadd [#allocation3], %s14
      %s16 = sshll.u32 [#allocation2], 4
      %s17 = int_to_ptr.vmem [resolvable:$true] %s16
      %22 = dma.hbm_to_vmem [thread:$0]  %s1, 1024, %s17, [#allocation3], 128, 128, 8
    $region9: #{tpu_custom_call.1} parent=1 // pred_fallthru
      _
    // Predicated region
    $region10: #{tpu_custom_call.1} parent=1 // pred_check
      _
    $region11: #{tpu_custom_call.1} parent=1 // pred_check_branch
      %24 = sbr.rel (0) target = $region13
    $region12: #{tpu_custom_call.1} parent=1 // pred_region
      %25 = dma.done [#allocation3], 1024
    $region13: #{tpu_custom_call.1} parent=1 // pred_fallthru
      _
    %v26 = vld [vmem:[%s0] sm:$0xff]
    %v27 = vld [vmem:[%s0 + $0x8] sm:$0xff]
    %v28 = vlaneseq
    %v29 = vand.u32 %v28, 127
    %30 = vset.pattern.permute.xlu0 0
    %31 = vperm.xlu0 %30, %v26
    %v32 = vpop.permute.xlu0 %31
    %33 = vset.pattern.permute.xlu0 0
    %34 = vperm.xlu0 %33, %v27
    %v35 = vpop.permute.xlu0 %34
    %vm36 = vcmp.eq.s32.totalorder %v29, %v32
    %vm37 = vcmp.eq.s32.totalorder %v29, %v35
    %v38 = vsel %vm36, 1, 0
    %v39 = vsel %vm37, 1, 0
    %v40 = vcvt.s32.f32 %v38
    %v41 = vcvt.s32.f32 %v39
    %v42 = vld [vmem:[#allocation2] sm:$0xff]
    %v43 = vld [vmem:[#allocation2 + $0x8] sm:$0xff]
    %v44 = vld [vmem:[#allocation2 + $0x10] sm:$0xff]
    %v45 = vld [vmem:[#allocation2 + $0x18] sm:$0xff]
    %v46 = vld [vmem:[#allocation2 + $0x20] sm:$0xff]
    %v47 = vld [vmem:[#allocation2 + $0x28] sm:$0xff]
    %v48 = vld [vmem:[#allocation2 + $0x30] sm:$0xff]
    %v49 = vld [vmem:[#allocation2 + $0x38] sm:$0xff]
    %vm50 = vcmask 523264
    %v52 = vsel %vm50, %v40, 0
    %v55 = vsel %vm50, %v41, 0
    %57 = vmatprep.subr.mxu0 0.0
    %58 = vmatpush1.msra.mxu0 %v42
    %59 = vmatprep.subr.mxu0 0.0
    %60 = vmatpush1.msra.mxu0 %v43
    %61 = vmatprep.subr.mxu0 0.0
    %62 = vmatpush1.msra.mxu0 %v44
    %63 = vmatprep.subr.mxu0 0.0
    %64 = vmatpush1.msra.mxu0 %v45
    %65 = vmatprep.subr.mxu0 0.0
    %66 = vmatpush1.msra.mxu0 %v46
    %67 = vmatprep.subr.mxu0 0.0
    %68 = vmatpush1.msra.mxu0 %v47
    %69 = vmatprep.subr.mxu0 0.0
    %70 = vmatpush1.msra.mxu0 %v48
    %71 = vmatprep.subr.mxu0 0.0
    %72 = vmatpush1.msra.mxu0 %v49
    %73 = vmatprep.subr.mxu0 0.0
    %74 = vmatpush1.msra.mxu0 0.0
    %75 = vmatprep.subr.mxu0 0.0
    %76 = vmatpush1.msra.mxu0 0.0
    %77 = vmatprep.subr.mxu0 0.0
    %78 = vmatpush1.msra.mxu0 0.0
    %79 = vmatprep.subr.mxu0 0.0
    %80 = vmatpush1.msra.mxu0 0.0
    %81 = vmatprep.subr.mxu0 0.0
    %82 = vmatpush1.msra.mxu0 0.0
    %83 = vmatprep.subr.mxu0 0.0
    %84 = vmatpush1.msra.mxu0 0.0
    %85 = vmatprep.subr.mxu0 0.0
    %86 = vmatpush1.msra.mxu0 0.0
    %87 = vmatprep.subr.mxu0 0.0
    %88 = vmatpush1.msra.mxu0 0.0
    %89 = vmatprep.subr.mxu0 0.0
    %90 = vmatpush1.msra.mxu0 0.0
    %91 = vmatprep.subr.mxu0 0.0
    %92 = vmatpush1.msra.mxu0 0.0
    %93 = vmatprep.subr.mxu0 0.0
    %94 = vmatpush1.msra.mxu0 0.0
    %95 = vmatprep.subr.mxu0 0.0
    %96 = vmatpush1.msra.mxu0 0.0
    %97 = vmatprep.subr.mxu0 0.0
    %98 = vmatpush1.msra.mxu0 0.0
    %99 = vmatprep.subr.mxu0 0.0
    %100 = vmatpush1.msra.mxu0 0.0
    %101 = vmatprep.subr.mxu0 0.0
    %102 = vmatpush1.msra.mxu0 0.0
    %103 = vmatprep.subr.mxu0 0.0
    %104 = vmatpush1.msra.mxu0 0.0
    %105 = vmatprep.subr.mxu0 0.0
    %106 = vmatpush1.msra.mxu0 0.0
    %107 = vmatprep.subr.mxu0 0.0
    %108 = vmatpush1.msra.mxu0 0.0
    %109 = vmatprep.subr.mxu0 0.0
    %110 = vmatpush1.msra.mxu0 0.0
    %111 = vmatprep.subr.mxu0 0.0
    %112 = vmatpush1.msra.mxu0 0.0
    %113 = vmatprep.subr.mxu0 0.0
    %114 = vmatpush1.msra.mxu0 0.0
    %115 = vmatprep.subr.mxu0 0.0
    %116 = vmatpush1.msra.mxu0 0.0
    %117 = vmatprep.subr.mxu0 0.0
    %118 = vmatpush1.msra.mxu0 0.0
    %119 = vmatprep.subr.mxu0 0.0
    %120 = vmatpush1.msra.mxu0 0.0
    %121 = vmatprep.mubr.f32.mxu0 0.0
    %122 = vmatmul.mubr.f32.gmra.mrb[0].mxu0 %v52
    %v123 = vpop.f32.mrb[0].mxu0
    %v124 = vadd.f32 0.0, %v123
    %v125 = vpop.f32.mrb[0].mxu0
    %126 = vmatprep.mubr.f32.mxu0 0.0
    %127 = vmatmul.mubr.f32.gmra.mrb[0].mxu0 %v55
    %v128 = vpop.f32.mrb[0].mxu0
    %v129 = vadd.f32 0.0, %v128
    %v130 = vpop.f32.mrb[0].mxu0
    %131 = vdwg.mxu0
    %132 = vst [vmem:[#allocation5] sm:$0xff] %v124
    %133 = vst [vmem:[#allocation5 + $0x8] sm:$0xff] %v129
    // Predicated region
    $region14: #{tpu_custom_call.1} parent=1 // pred_check
      _
    $region15: #{tpu_custom_call.1} parent=1 // pred_check_branch
      %135 = sbr.rel (0) target = $region17
    $region16: #{tpu_custom_call.1} parent=1 // pred_region
      %s137 = ssub.s32 256, 256
      %138 = vsyncadd [#allocation4], %s137
      %s139 = sshll.u32 [#allocation5], 4
      %s140 = int_to_ptr.vmem [resolvable:$true] %s139
      %145 = dma.vmem_to_hbm [thread:$0]  %s140, 256, %s2, [#allocation4], 128, 128, 8
    $region17: #{tpu_custom_call.1} parent=1 // pred_fallthru
      _
    // Predicated region
    $region18: #{tpu_custom_call.1} parent=1 // pred_check
      _
    $region19: #{tpu_custom_call.1} parent=1 // pred_check_branch
      %147 = sbr.rel (0) target = $region21
    $region20: #{tpu_custom_call.1} parent=1 // pred_region
      %148 = dma.done [#allocation4], 256
    $region21: #{tpu_custom_call.1} parent=1 // pred_fallthru
      _
    %149 = vsyncpa [#allocation3], 1
    %150 = vsyncpa [#allocation4], 1

</llo_original>
